<compile_context>
chip_gen: v7x
topology: tpu7x:2x2x1
jax: 0.10.0
libtpu: 0.0.40
codegen_flags: <defaults>
</compile_context>

<pallas_src>
import numpy as np

import jax
import jax.numpy as jnp
from jax.experimental import pallas as pl
from jax.experimental.pallas import tpu as pltpu


# ----------------------------- Pallas kernel -------------------------------
def _stt_embed_kernel(p_ref, w_ref, add_ref, cls_ref, out_ref):
    """One grid step = `bb` whole batch elements.

    p_ref   : (bb, N, K)    bf16 patch vectors (im2col of x)
    w_ref   : (K, E)        f32  flattened conv weight         (grid-invariant)
    add_ref : (N, E)        f32  pos-embedding[1:] + conv bias (grid-invariant)
    cls_ref : (1, E)        f32  cls token + pos-embedding[0]  (grid-invariant)
    out_ref : (bb, N+1, E)  full embeddings (cls row followed by N tokens)
    """
    for b in range(p_ref.shape[0]):                      # static, bb is small
        tok = jnp.dot(p_ref[b], w_ref[...],
                      preferred_element_type=jnp.float32)
        out_ref[b, 0:1, :] = cls_ref[...].astype(out_ref.dtype)
        out_ref[b, 1:, :] = (tok + add_ref[...]).astype(out_ref.dtype)


# --------------------------- tiling / VMEM policy ---------------------------
def _vmem_budget_bytes():
    """~80% of physical per-core VMEM (headroom for Mosaic internal scratch):
    ~51 MiB on v7x (64 MiB physical), ~102 MiB on v5e/v6e (128 MiB)."""
    cap = 64 * 1024 * 1024          # conservative fallback (v7x-sized)
    try:
        cap = int(pltpu.get_tpu_info().vmem_capacity_bytes)
    except Exception:
        # Query failure only affects this perf hint, never kernel semantics.
        pass
    return int(cap * 0.80)


def _supports_single_buffering():
    """Grid-invariant operands only need one VMEM buffer.  Per review, probe
    with specific exceptions only (older jax: missing kwarg / symbol)."""
    try:
        pl.BlockSpec((8, 128), lambda m: (0, 0), pipeline_mode=pl.Buffered(1))
        return True
    except (TypeError, AttributeError):
        return False


def _vmem_need_bytes(bb, n_tok, k, e, patch_isz, out_isz, single_buf):
    inv = 1 if single_buf else 2
    return (2 * bb * n_tok * k * patch_isz          # patches  (double-buffered)
            + inv * k * e * 4                       # weight   (grid-invariant)
            + inv * (n_tok * e * 4 + e * 4)         # pos+bias, cls row
            + 2 * bb * (n_tok + 1) * e * out_isz)   # output   (double-buffered)


def _batches_per_step(batch, n_tok, k, e, patch_isz, out_isz,
                      vmem_budget, single_buf, min_split_bytes=512 * 1024):
    """Batch elements per grid step.

    Largest divisor of `batch` that fits the VMEM budget; a >=2-step split is
    only kept when each step still moves >= min_split_bytes of patch data
    (megacore on v7x only pays then; on single-TC v5e/v6e extra steps are pure
    per-step overhead)."""
    divisors = [d for d in range(1, batch + 1) if batch % d == 0]
    fits = [d for d in divisors
            if _vmem_need_bytes(d, n_tok, k, e, patch_isz, out_isz,
                                single_buf) <= vmem_budget]
    if not fits:
        fits = [1]
    bb = max(fits)
    if bb == batch and batch >= 2:
        split = max((d for d in fits if d < batch), default=None)
        if split is not None and split * n_tok * k * patch_isz >= min_split_bytes:
            bb = split
    return bb


# ------------------------------ pallas wrapper ------------------------------
def stt_embd_patch_pallas(patches, w_mat, add_rows, cls_row, batch_per_step,
                          out_dtype=jnp.float32):
    """patches: (B, N, K) bf16; w_mat: (K, E) f32; add_rows: (N, E) f32;
    cls_row: (1, E) f32  ->  embeddings (B, N+1, E)."""
    B, N, K = patches.shape
    E = w_mat.shape[1]
    bb = batch_per_step
    assert B % bb == 0
    assert w_mat.shape == (K, E)
    assert add_rows.shape == (N, E) and cls_row.shape == (1, E)
    grid = (B // bb,)

    single_buf = _supports_single_buffering()
    out_isz = np.dtype(out_dtype).itemsize
    need = _vmem_need_bytes(bb, N, K, E, patches.dtype.itemsize, out_isz,
                            single_buf)
    budget = _vmem_budget_bytes()
    vmem_limit = int(min(budget, max(need + (4 << 20), 16 << 20)))
    vmem_limit = max(vmem_limit, need + (2 << 20))

    def inv_spec(shape):
        # Grid-invariant operand: same block every step; single-buffer when the
        # running jax supports pipeline_mode.
        if single_buf:
            return pl.BlockSpec(shape, lambda m: (0,) * len(shape),
                                pipeline_mode=pl.Buffered(1))
        return pl.BlockSpec(shape, lambda m: (0,) * len(shape))

    return pl.pallas_call(
        _stt_embed_kernel,
        out_shape=jax.ShapeDtypeStruct((B, N + 1, E), out_dtype),
        grid_spec=pltpu.PrefetchScalarGridSpec(
            num_scalar_prefetch=0,
            grid=grid,
            in_specs=[
                pl.BlockSpec((bb, N, K), lambda m: (m, 0, 0)),
                inv_spec((K, E)),
                inv_spec((N, E)),
                inv_spec((1, E)),
            ],
            out_specs=pl.BlockSpec((bb, N + 1, E), lambda m: (m, 0, 0)),
        ),
        compiler_params=pltpu.CompilerParams(
            dimension_semantics=("parallel",),
            vmem_limit_bytes=vmem_limit,
        ),
    )(patches, w_mat, add_rows, cls_row)


# ------------------------------ glue / module ------------------------------
def extract_patches(x, patch, dtype=jnp.bfloat16):
    """x: (B, T, W, H, C) -> (B, N, C*p*p), N = T*(W/p)*(H/p).

    Token order [t, patch-row i, patch-col j] and K order (c, di, dj) match
    Conv2d(kernel=stride=p) on x.permute(0,4,2,3,1)[..., t] with its weight
    flattened as (E, C*p*p).  Under jit, the cast+transpose+reshape compile to
    a single fusion: one read of x (f32), one write of the bf16 patch matrix.
    """
    B, T, W, H, C = x.shape
    p = patch
    ni, nj = W // p, H // p
    xr = x.astype(dtype).reshape(B, T, ni, p, nj, p, C)
    xr = jnp.transpose(xr, (0, 1, 2, 4, 6, 3, 5))        # (B,T,i,j,c,di,dj)
    return xr.reshape(B, T * ni * nj, C * p * p)


def stt_embd_patch_forward(x, params, patch, out_dtype=jnp.float32):
    """Forward pass equivalent to STTEmbdPatch.forward (2d conv, dropout=id)."""
    B, T, W, H, C = x.shape
    E = params["bias"].shape[0]
    N = T * (W // patch) * (H // patch)

    patches = extract_patches(x, patch)                       # (B, N, K) bf16
    w_mat = params["w_mat"].astype(jnp.float32)               # (K, E) f32
    pos = params["pos"].astype(jnp.float32)                   # (1, N+1, E)
    add_rows = pos[0, 1:, :] + params["bias"][None, :]        # (N, E)
    cls_row = params["cls"][0] + pos[0, 0:1, :]               # (1, E)

    bb = _batches_per_step(
        B, N, patches.shape[-1], E,
        patches.dtype.itemsize, np.dtype(out_dtype).itemsize,
        _vmem_budget_bytes(), _supports_single_buffering())
    return stt_embd_patch_pallas(patches, w_mat, add_rows, cls_row, bb,
                                 out_dtype=out_dtype)


def init_params(key, in_channels, embd_size, patch, n_patches):
    K = in_channels * patch * patch
    k1, k2, k3, k4 = jax.random.split(key, 4)
    # Conv2d weight (E, C, p, p) flattened to matmul form (K, E); kept in f32
    # (grid-invariant, DMA'd once) per the review's parity concern.
    w = jax.random.normal(k1, (embd_size, in_channels, patch, patch),
                          jnp.float32) * 0.02
    w_mat = w.reshape(embd_size, K).T                         # (K, E)
    bias = jax.random.normal(k2, (embd_size,), jnp.float32) * 0.02
    # Module inits pos/cls to zeros; use small values so the adds are exercised.
    pos = jax.random.normal(k3, (1, n_patches + 1, embd_size),
                            jnp.float32) * 0.02
    cls = jax.random.normal(k4, (1, 1, embd_size), jnp.float32) * 0.02
    return {"w_mat": w_mat, "bias": bias, "pos": pos, "cls": cls}


if __name__ == "__main__":
    # Config implied by the module docstring: img_size=32, patches=8,
    # temporal_res=4 -> 64 patch tokens; small in_channels=4, embd_size=128
    # (multiple of 128 -> lane-dense output stores).
    B, T, W, H, C = 2, 4, 32, 32, 4
    PATCH, E = 8, 128
    N = T * (W // PATCH) * (H // PATCH)                       # 64 patch tokens

    key = jax.random.PRNGKey(0)
    kx, kp = jax.random.split(key)
    x = jax.random.normal(kx, (B, T, W, H, C), jnp.float32)
    params = init_params(kp, C, E, PATCH, N)

    fwd = jax.jit(stt_embd_patch_forward, static_argnums=(2,))
    out = jax.block_until_ready(fwd(x, params, PATCH))
    assert out.shape == (B, N + 1, E), out.shape

    # Reference cls row (shared by both checks).
    ref_cls = jnp.broadcast_to(params["cls"] + params["pos"][:, 0:1, :],
                               (B, 1, E))

    # Reference 1: same bf16 patch quantization, plain-JAX matmul (isolates the
    # kernel; only MXU-vs-XLA accumulation differences remain).
    patches_bf = extract_patches(x, PATCH).astype(jnp.float32)       # (B,N,K)
    ref_tok = (jnp.einsum("bnk,ke->bne", patches_bf, params["w_mat"])
               + params["bias"][None, None, :] + params["pos"][:, 1:, :])
    ref = jnp.concatenate([ref_cls, ref_tok], axis=1)
    err1 = float(jnp.max(jnp.abs(out - ref)))
    assert jnp.allclose(out, ref, atol=2e-3, rtol=2e-3), err1

    # Reference 2: full f32 path (bounds the bf16 patch-quantization error).
    patches_f32 = extract_patches(x, PATCH, dtype=jnp.float32)
    ref_tok_f32 = (jnp.einsum("bnk,ke->bne", patches_f32, params["w_mat"])
                   + params["bias"][None, None, :] + params["pos"][:, 1:, :])
    ref_f32 = jnp.concatenate([ref_cls, ref_tok_f32], axis=1)
    err2 = float(jnp.max(jnp.abs(out - ref_f32)))
    assert jnp.allclose(out, ref_f32, atol=5e-2, rtol=1e-2), err2

    print("KERNEL_OK")
</pallas_src>

<mosaic_0001>
module attributes {stable_mosaic.version = 11 : i64} {
  func.func @_stt_embed_kernel(%arg0: i32, %arg1: memref<2x64x256xbf16, #tpu.memory_space<vmem>>, %arg2: memref<256x128xf32, #tpu.memory_space<vmem>>, %arg3: memref<64x128xf32, #tpu.memory_space<vmem>>, %arg4: memref<1x128xf32, #tpu.memory_space<vmem>>, %arg5: memref<2x65x128xf32, #tpu.memory_space<vmem>>) attributes {dimension_semantics = [#tpu.dimension_semantics<parallel>], iteration_bounds = array<i64: 1>, scalar_prefetch = 0 : i64, scratch_operands = 0 : i64, tpu.core_type = #tpu.core_type<tc>, window_params = [{transform_indices = @transform_0, window_bounds = array<i64: 2, 64, 256>}, {pipeline_mode = #tpu.pipeline_mode<synchronous>, transform_indices = @transform_1, window_bounds = array<i64: 256, 128>}, {pipeline_mode = #tpu.pipeline_mode<synchronous>, transform_indices = @transform_2, window_bounds = array<i64: 64, 128>}, {pipeline_mode = #tpu.pipeline_mode<synchronous>, transform_indices = @transform_3, window_bounds = array<i64: 1, 128>}, {transform_indices = @transform_4, window_bounds = array<i64: 2, 65, 128>}]} {
    %c0 = arith.constant 0 : index
    %c0_0 = arith.constant 0 : index
    %c0_1 = arith.constant 0 : index
    %0 = vector.load %arg1[%c0, %c0_0, %c0_1] : memref<2x64x256xbf16, #tpu.memory_space<vmem>>, vector<1x64x256xbf16>
    %1 = vector.shape_cast %0 : vector<1x64x256xbf16> to vector<64x256xbf16>
    %c0_2 = arith.constant 0 : index
    %c0_3 = arith.constant 0 : index
    %2 = vector.load %arg2[%c0_2, %c0_3] : memref<256x128xf32, #tpu.memory_space<vmem>>, vector<256x128xf32>
    %cst = arith.constant dense<0.000000e+00> : vector<64x128xf32>
    %3 = tpu.matmul %1, %2, %cst {dimension_numbers = #tpu.dot_dimension_numbers<[1], [0], [0], [1], [0, 0, 1, 1], [], []>} : vector<64x256xbf16>, vector<256x128xf32>, vector<64x128xf32> -> vector<64x128xf32>
    %c0_4 = arith.constant 0 : index
    %c0_5 = arith.constant 0 : index
    %4 = vector.load %arg4[%c0_4, %c0_5] : memref<1x128xf32, #tpu.memory_space<vmem>>, vector<1x128xf32>
    %c0_6 = arith.constant 0 : index
    %c0_7 = arith.constant 0 : index
    %c0_8 = arith.constant 0 : index
    %5 = vector.load %arg5[%c0_6, %c0_7, %c0_8] : memref<2x65x128xf32, #tpu.memory_space<vmem>>, vector<1x1x128xf32>
    %6 = vector.shape_cast %5 : vector<1x1x128xf32> to vector<1x128xf32>
    %7 = vector.shape_cast %4 : vector<1x128xf32> to vector<1x1x128xf32>
    tpu.vector_store %arg5[%c0_6, %c0_7, %c0_8], %7 {strides = array<i32>} : memref<2x65x128xf32, #tpu.memory_space<vmem>>, vector<1x1x128xf32>,
    %c0_9 = arith.constant 0 : index
    %c0_10 = arith.constant 0 : index
    %8 = vector.load %arg3[%c0_9, %c0_10] : memref<64x128xf32, #tpu.memory_space<vmem>>, vector<64x128xf32>
    %9 = arith.addf %3, %8 : vector<64x128xf32>
    %c0_11 = arith.constant 0 : index
    %c1 = arith.constant 1 : index
    %c0_12 = arith.constant 0 : index
    %10 = vector.load %arg5[%c0_11, %c1, %c0_12] : memref<2x65x128xf32, #tpu.memory_space<vmem>>, vector<1x64x128xf32>
    %11 = vector.shape_cast %10 : vector<1x64x128xf32> to vector<64x128xf32>
    %12 = vector.shape_cast %9 : vector<64x128xf32> to vector<1x64x128xf32>
    tpu.vector_store %arg5[%c0_11, %c1, %c0_12], %12 {strides = array<i32>} : memref<2x65x128xf32, #tpu.memory_space<vmem>>, vector<1x64x128xf32>,
    %c1_13 = arith.constant 1 : index
    %c0_14 = arith.constant 0 : index
    %c0_15 = arith.constant 0 : index
    %13 = vector.load %arg1[%c1_13, %c0_14, %c0_15] : memref<2x64x256xbf16, #tpu.memory_space<vmem>>, vector<1x64x256xbf16>
    %14 = vector.shape_cast %13 : vector<1x64x256xbf16> to vector<64x256xbf16>
    %c0_16 = arith.constant 0 : index
    %c0_17 = arith.constant 0 : index
    %15 = vector.load %arg2[%c0_16, %c0_17] : memref<256x128xf32, #tpu.memory_space<vmem>>, vector<256x128xf32>
    %cst_18 = arith.constant dense<0.000000e+00> : vector<64x128xf32>
    %16 = tpu.matmul %14, %15, %cst_18 {dimension_numbers = #tpu.dot_dimension_numbers<[1], [0], [0], [1], [0, 0, 1, 1], [], []>} : vector<64x256xbf16>, vector<256x128xf32>, vector<64x128xf32> -> vector<64x128xf32>
    %c0_19 = arith.constant 0 : index
    %c0_20 = arith.constant 0 : index
    %17 = vector.load %arg4[%c0_19, %c0_20] : memref<1x128xf32, #tpu.memory_space<vmem>>, vector<1x128xf32>
    %c1_21 = arith.constant 1 : index
    %c0_22 = arith.constant 0 : index
    %c0_23 = arith.constant 0 : index
    %18 = vector.load %arg5[%c1_21, %c0_22, %c0_23] : memref<2x65x128xf32, #tpu.memory_space<vmem>>, vector<1x1x128xf32>
    %19 = vector.shape_cast %18 : vector<1x1x128xf32> to vector<1x128xf32>
    %20 = vector.shape_cast %17 : vector<1x128xf32> to vector<1x1x128xf32>
    tpu.vector_store %arg5[%c1_21, %c0_22, %c0_23], %20 {strides = array<i32>} : memref<2x65x128xf32, #tpu.memory_space<vmem>>, vector<1x1x128xf32>,
    %c0_24 = arith.constant 0 : index
    %c0_25 = arith.constant 0 : index
    %21 = vector.load %arg3[%c0_24, %c0_25] : memref<64x128xf32, #tpu.memory_space<vmem>>, vector<64x128xf32>
    %22 = arith.addf %16, %21 : vector<64x128xf32>
    %c1_26 = arith.constant 1 : index
    %c1_27 = arith.constant 1 : index
    %c0_28 = arith.constant 0 : index
    %23 = vector.load %arg5[%c1_26, %c1_27, %c0_28] : memref<2x65x128xf32, #tpu.memory_space<vmem>>, vector<1x64x128xf32>
    %24 = vector.shape_cast %23 : vector<1x64x128xf32> to vector<64x128xf32>
    %25 = vector.shape_cast %22 : vector<64x128xf32> to vector<1x64x128xf32>
    tpu.vector_store %arg5[%c1_26, %c1_27, %c0_28], %25 {strides = array<i32>} : memref<2x65x128xf32, #tpu.memory_space<vmem>>, vector<1x64x128xf32>,
    return
  }
  func.func @transform_0(%arg0: i32) -> (i32, i32, i32) {
    %c0_i32 = arith.constant 0 : i32
    %c0_i32_0 = arith.constant 0 : i32
    %c0_i32_1 = arith.constant 0 : i32
    return %arg0, %c0_i32, %c0_i32_0 : i32, i32, i32
  }
  func.func @transform_1(%arg0: i32) -> (i32, i32) {
    %c0_i32 = arith.constant 0 : i32
    %c0_i32_0 = arith.constant 0 : i32
    %c0_i32_1 = arith.constant 0 : i32
    return %c0_i32, %c0_i32_0 : i32, i32
  }
  func.func @transform_2(%arg0: i32) -> (i32, i32) {
    %c0_i32 = arith.constant 0 : i32
    %c0_i32_0 = arith.constant 0 : i32
    %c0_i32_1 = arith.constant 0 : i32
    return %c0_i32, %c0_i32_0 : i32, i32
  }
  func.func @transform_3(%arg0: i32) -> (i32, i32) {
    %c0_i32 = arith.constant 0 : i32
    %c0_i32_0 = arith.constant 0 : i32
    %c0_i32_1 = arith.constant 0 : i32
    return %c0_i32, %c0_i32_0 : i32, i32
  }
  func.func @transform_4(%arg0: i32) -> (i32, i32, i32) {
    %c0_i32 = arith.constant 0 : i32
    %c0_i32_0 = arith.constant 0 : i32
    %c0_i32_1 = arith.constant 0 : i32
    return %arg0, %c0_i32, %c0_i32_0 : i32, i32, i32
  }
}

</mosaic_0001>

<llo_original>
// kernel: stt_embd_patch_forward.1
$region0: #{stt_embd_patch_forward.1}
  #allocation0 [shape = 'u32[]', space=smem, size = 0x4, offset = 0x4, fixed_abs, tag = 'smem constant byte address 0x4 - core index']
  #allocation1 [shape = 'u32[144,128]{1,0:T(1,128)}', space=vmem, size = 0x12000, scoped, tag = 'internal scratch']
  %s0 = inlined_call_operand.vmem [shape: bf16[2,64,256], index: 0, kind: input, shape index: {}]
  %s1 = inlined_call_operand.vmem [shape: f32[256,128], index: 1, kind: input, shape index: {}]
  %s2 = inlined_call_operand.vmem [shape: f32[64,128], index: 2, kind: input, shape index: {}]
  %s3 = inlined_call_operand.vmem [shape: f32[1,128], index: 3, kind: input, shape index: {}]
  %s4 = inlined_call_operand.vmem [shape: f32[2,65,128], index: 4, kind: output, shape index: {}]
  %s5 = sld [smem:[#allocation0]]
  $region26: #{stt_embd_patch_forward.1} parent=0
    _
  %s7 = ssub.s32 1, %s5
  %s8 = scalar_select 0, %s7, %s5
  // Predicated region
  $region2: #{stt_embd_patch_forward.1} parent=0 // pred_check
    _
  $region3: #{stt_embd_patch_forward.1} parent=0 // pred_check_branch
    %10 = sbr.rel (0) target = $region5
  $region4: #{stt_embd_patch_forward.1} parent=0 // pred_region
    _
  $region5: #{stt_embd_patch_forward.1} parent=0 // pred_fallthru
    _
  // Predicated region
  $region6: #{stt_embd_patch_forward.1} parent=0 // pred_check
    _
  $region7: #{stt_embd_patch_forward.1} parent=0 // pred_check_branch
    %12 = sbr.rel (0) target = $region9
  $region8: #{stt_embd_patch_forward.1} parent=0 // pred_region
    _
  $region9: #{stt_embd_patch_forward.1} parent=0 // pred_fallthru
    _
  // Predicated region
  $region10: #{stt_embd_patch_forward.1} parent=0 // pred_check
    _
  $region11: #{stt_embd_patch_forward.1} parent=0 // pred_check_branch
    %14 = sbr.rel (0) target = $region13
  $region12: #{stt_embd_patch_forward.1} parent=0 // pred_region
    _
  $region13: #{stt_embd_patch_forward.1} parent=0 // pred_fallthru
    _
  // Predicated region
  $region14: #{stt_embd_patch_forward.1} parent=0 // pred_check
    _
  $region15: #{stt_embd_patch_forward.1} parent=0 // pred_check_branch
    %16 = sbr.rel (0) target = $region17
  $region16: #{stt_embd_patch_forward.1} parent=0 // pred_region
    _
  $region17: #{stt_embd_patch_forward.1} parent=0 // pred_fallthru
    _
  %v17 = vld [vmem:[%s0] sm:$0xff]
  %v18 = vld [vmem:[%s0 + $0x8] sm:$0xff]
  %v19 = vld [vmem:[%s0 + $0x10] sm:$0xff]
  %v20 = vld [vmem:[%s0 + $0x18] sm:$0xff]
  %v21 = vld [vmem:[%s0 + $0x20] sm:$0xff]
  %v22 = vld [vmem:[%s0 + $0x28] sm:$0xff]
  %v23 = vld [vmem:[%s0 + $0x30] sm:$0xff]
  %v24 = vld [vmem:[%s0 + $0x38] sm:$0xff]
  %v25 = vld [vmem:[%s1] sm:$0xff]
  %v26 = vld [vmem:[%s1 + $0x8] sm:$0xff]
  %v27 = vld [vmem:[%s1 + $0x10] sm:$0xff]
  %v28 = vld [vmem:[%s1 + $0x18] sm:$0xff]
  %v29 = vld [vmem:[%s1 + $0x20] sm:$0xff]
  %v30 = vld [vmem:[%s1 + $0x28] sm:$0xff]
  %v31 = vld [vmem:[%s1 + $0x30] sm:$0xff]
  %v32 = vld [vmem:[%s1 + $0x38] sm:$0xff]
  %v33 = vld [vmem:[%s1 + $0x40] sm:$0xff]
  %v34 = vld [vmem:[%s1 + $0x48] sm:$0xff]
  %v35 = vld [vmem:[%s1 + $0x50] sm:$0xff]
  %v36 = vld [vmem:[%s1 + $0x58] sm:$0xff]
  %v37 = vld [vmem:[%s1 + $0x60] sm:$0xff]
  %v38 = vld [vmem:[%s1 + $0x68] sm:$0xff]
  %v39 = vld [vmem:[%s1 + $0x70] sm:$0xff]
  %v40 = vld [vmem:[%s1 + $0x78] sm:$0xff]
  %v41 = vld [vmem:[%s1 + $0x80] sm:$0xff]
  %v42 = vld [vmem:[%s1 + $0x88] sm:$0xff]
  %v43 = vld [vmem:[%s1 + $0x90] sm:$0xff]
  %v44 = vld [vmem:[%s1 + $0x98] sm:$0xff]
  %v45 = vld [vmem:[%s1 + $0xa0] sm:$0xff]
  %v46 = vld [vmem:[%s1 + $0xa8] sm:$0xff]
  %v47 = vld [vmem:[%s1 + $0xb0] sm:$0xff]
  %v48 = vld [vmem:[%s1 + $0xb8] sm:$0xff]
  %v49 = vld [vmem:[%s1 + $0xc0] sm:$0xff]
  %v50 = vld [vmem:[%s1 + $0xc8] sm:$0xff]
  %v51 = vld [vmem:[%s1 + $0xd0] sm:$0xff]
  %v52 = vld [vmem:[%s1 + $0xd8] sm:$0xff]
  %v53 = vld [vmem:[%s1 + $0xe0] sm:$0xff]
  %v54 = vld [vmem:[%s1 + $0xe8] sm:$0xff]
  %v55 = vld [vmem:[%s1 + $0xf0] sm:$0xff]
  %v56 = vld [vmem:[%s1 + $0xf8] sm:$0xff]
  %v57 = vld [vmem:[%s3] sm:$0x1]
  %58 = vst [vmem:[%s4] sm:$0x1] %v57
  %v59 = vld [vmem:[%s2] sm:$0xff]
  %v60 = vld [vmem:[%s2 + $0x8] sm:$0xff]
  %v61 = vld [vmem:[%s2 + $0x10] sm:$0xff]
  %v62 = vld [vmem:[%s2 + $0x18] sm:$0xff]
  %v63 = vld [vmem:[%s2 + $0x20] sm:$0xff]
  %v64 = vld [vmem:[%s2 + $0x28] sm:$0xff]
  %v65 = vld [vmem:[%s2 + $0x30] sm:$0xff]
  %v66 = vld [vmem:[%s2 + $0x38] sm:$0xff]
  %v75 = vunpack.c.l.b16 %v17
  %v76 = vunpack.c.h.b16 %v17
  %v77 = vunpack.c.l.b16 %v18
  %v78 = vunpack.c.h.b16 %v18
  %v79 = vunpack.c.l.b16 %v19
  %v80 = vunpack.c.h.b16 %v19
  %v81 = vunpack.c.l.b16 %v20
  %v82 = vunpack.c.h.b16 %v20
  %v83 = vunpack.c.l.b16 %v21
  %v84 = vunpack.c.h.b16 %v21
  %v85 = vunpack.c.l.b16 %v22
  %v86 = vunpack.c.h.b16 %v22
  %v87 = vunpack.c.l.b16 %v23
  %v88 = vunpack.c.h.b16 %v23
  %v89 = vunpack.c.l.b16 %v24
  %v90 = vunpack.c.h.b16 %v24
  %v91 = vpack.c.b16 %v77, %v75
  %v92 = vpack.c.b16 %v78, %v76
  %v93 = vpack.c.b16 %v81, %v79
  %v94 = vpack.c.b16 %v82, %v80
  %v95 = vpack.c.b16 %v85, %v83
  %v96 = vpack.c.b16 %v86, %v84
  %v97 = vpack.c.b16 %v89, %v87
  %v98 = vpack.c.b16 %v90, %v88
  %107 = vmatprep.subr.mxu0 0.0
  %108 = vmatpush1.msra.mxu0 %v25
  %109 = vmatprep.subr.mxu0 0.0
  %110 = vmatpush1.msra.mxu0 %v26
  %111 = vmatprep.subr.mxu0 0.0
  %112 = vmatpush1.msra.mxu0 %v27
  %113 = vmatprep.subr.mxu0 0.0
  %114 = vmatpush1.msra.mxu0 %v28
  %115 = vmatprep.subr.mxu0 0.0
  %116 = vmatpush1.msra.mxu0 %v29
  %117 = vmatprep.subr.mxu0 0.0
  %118 = vmatpush1.msra.mxu0 %v30
  %119 = vmatprep.subr.mxu0 0.0
  %120 = vmatpush1.msra.mxu0 %v31
  %121 = vmatprep.subr.mxu0 0.0
  %122 = vmatpush1.msra.mxu0 %v32
  %123 = vmatprep.subr.mxu0 0.0
  %124 = vmatpush1.msra.mxu0 %v33
  %125 = vmatprep.subr.mxu0 0.0
  %126 = vmatpush1.msra.mxu0 %v34
  %127 = vmatprep.subr.mxu0 0.0
  %128 = vmatpush1.msra.mxu0 %v35
  %129 = vmatprep.subr.mxu0 0.0
  %130 = vmatpush1.msra.mxu0 %v36
  %131 = vmatprep.subr.mxu0 0.0
  %132 = vmatpush1.msra.mxu0 %v37
  %133 = vmatprep.subr.mxu0 0.0
  %134 = vmatpush1.msra.mxu0 %v38
  %135 = vmatprep.subr.mxu0 0.0
  %136 = vmatpush1.msra.mxu0 %v39
  %137 = vmatprep.subr.mxu0 0.0
  %138 = vmatpush1.msra.mxu0 %v40
  %139 = vmatprep.subr.mxu0 0.0
  %140 = vmatpush1.msra.mxu0 %v41
  %141 = vmatprep.subr.mxu0 0.0
  %142 = vmatpush1.msra.mxu0 %v42
  %143 = vmatprep.subr.mxu0 0.0
  %144 = vmatpush1.msra.mxu0 %v43
  %145 = vmatprep.subr.mxu0 0.0
  %146 = vmatpush1.msra.mxu0 %v44
  %147 = vmatprep.subr.mxu0 0.0
  %148 = vmatpush1.msra.mxu0 %v45
  %149 = vmatprep.subr.mxu0 0.0
  %150 = vmatpush1.msra.mxu0 %v46
  %151 = vmatprep.subr.mxu0 0.0
  %152 = vmatpush1.msra.mxu0 %v47
  %153 = vmatprep.subr.mxu0 0.0
  %154 = vmatpush1.msra.mxu0 %v48
  %155 = vmatprep.subr.mxu0 0.0
  %156 = vmatpush1.msra.mxu0 %v49
  %157 = vmatprep.subr.mxu0 0.0
  %158 = vmatpush1.msra.mxu0 %v50
  %159 = vmatprep.subr.mxu0 0.0
  %160 = vmatpush1.msra.mxu0 %v51
  %161 = vmatprep.subr.mxu0 0.0
  %162 = vmatpush1.msra.mxu0 %v52
  %163 = vmatprep.subr.mxu0 0.0
  %164 = vmatpush1.msra.mxu0 %v53
  %165 = vmatprep.subr.mxu0 0.0
  %166 = vmatpush1.msra.mxu0 %v54
  %167 = vmatprep.subr.mxu0 0.0
  %168 = vmatpush1.msra.mxu0 %v55
  %169 = vmatprep.subr.mxu0 0.0
  %170 = vmatpush1.msra.mxu0 %v56
  %171 = vmatprep.mubr.bf16.mxu0 %v92
  %172 = vmatmul.mubr.bf16.gmra.mrb[0].mxu0 %v91
  %v173 = vpop.f32.mrb[0].mxu0
  %v174 = vadd.f32 %v59, %v173
  %v175 = vpop.f32.mrb[0].mxu0
  %v176 = vpop.f32.mrb[0].mxu0
  %v177 = vadd.f32 %v60, %v176
  %v178 = vpop.f32.mrb[0].mxu0
  %179 = vmatprep.mubr.bf16.mxu0 %v94
  %180 = vmatmul.mubr.bf16.gmra.mrb[0].mxu0 %v93
  %v181 = vpop.f32.mrb[0].mxu0
  %v182 = vadd.f32 %v61, %v181
  %v183 = vpop.f32.mrb[0].mxu0
  %v184 = vpop.f32.mrb[0].mxu0
  %v185 = vadd.f32 %v62, %v184
  %v186 = vpop.f32.mrb[0].mxu0
  %187 = vmatprep.mubr.bf16.mxu0 %v96
  %188 = vmatmul.mubr.bf16.gmra.mrb[0].mxu0 %v95
  %v189 = vpop.f32.mrb[0].mxu0
  %v190 = vadd.f32 %v63, %v189
  %v191 = vpop.f32.mrb[0].mxu0
  %v192 = vpop.f32.mrb[0].mxu0
  %v193 = vadd.f32 %v64, %v192
  %v194 = vpop.f32.mrb[0].mxu0
  %195 = vmatprep.mubr.bf16.mxu0 %v98
  %196 = vmatmul.mubr.bf16.gmra.mrb[0].mxu0 %v97
  %v197 = vpop.f32.mrb[0].mxu0
  %v198 = vadd.f32 %v65, %v197
  %v199 = vpop.f32.mrb[0].mxu0
  %v200 = vpop.f32.mrb[0].mxu0
  %v201 = vadd.f32 %v66, %v200
  %v202 = vpop.f32.mrb[0].mxu0
  %203 = vdwg.mxu0
  %204 = vst [vmem:[%s4 + $0x1] sm:$0xff] %v174
  %205 = vst [vmem:[%s4 + $0x9] sm:$0xff] %v177
  %206 = vst [vmem:[%s4 + $0x11] sm:$0xff] %v182
  %207 = vst [vmem:[%s4 + $0x19] sm:$0xff] %v185
  %208 = vst [vmem:[%s4 + $0x21] sm:$0xff] %v190
  %209 = vst [vmem:[%s4 + $0x29] sm:$0xff] %v193
  %210 = vst [vmem:[%s4 + $0x31] sm:$0xff] %v198
  %211 = vst [vmem:[%s4 + $0x39] sm:$0xff] %v201
  %s212 = scalar_lea.vmem %s0, 64
  %v213 = vld [vmem:[%s212] sm:$0xff]
  %v214 = vld [vmem:[%s212 + $0x8] sm:$0xff]
  %v215 = vld [vmem:[%s212 + $0x10] sm:$0xff]
  %v216 = vld [vmem:[%s212 + $0x18] sm:$0xff]
  %v217 = vld [vmem:[%s212 + $0x20] sm:$0xff]
  %v218 = vld [vmem:[%s212 + $0x28] sm:$0xff]
  %v219 = vld [vmem:[%s212 + $0x30] sm:$0xff]
  %v220 = vld [vmem:[%s212 + $0x38] sm:$0xff]
  %v221 = vld [vmem:[%s1] sm:$0xff]
  %v222 = vld [vmem:[%s1 + $0x8] sm:$0xff]
  %v223 = vld [vmem:[%s1 + $0x10] sm:$0xff]
  %v224 = vld [vmem:[%s1 + $0x18] sm:$0xff]
  %v225 = vld [vmem:[%s1 + $0x20] sm:$0xff]
  %v226 = vld [vmem:[%s1 + $0x28] sm:$0xff]
  %v227 = vld [vmem:[%s1 + $0x30] sm:$0xff]
  %v228 = vld [vmem:[%s1 + $0x38] sm:$0xff]
  %v229 = vld [vmem:[%s1 + $0x40] sm:$0xff]
  %v230 = vld [vmem:[%s1 + $0x48] sm:$0xff]
  %v231 = vld [vmem:[%s1 + $0x50] sm:$0xff]
  %v232 = vld [vmem:[%s1 + $0x58] sm:$0xff]
  %v233 = vld [vmem:[%s1 + $0x60] sm:$0xff]
  %v234 = vld [vmem:[%s1 + $0x68] sm:$0xff]
  %v235 = vld [vmem:[%s1 + $0x70] sm:$0xff]
  %v236 = vld [vmem:[%s1 + $0x78] sm:$0xff]
  %v237 = vld [vmem:[%s1 + $0x80] sm:$0xff]
  %v238 = vld [vmem:[%s1 + $0x88] sm:$0xff]
  %v239 = vld [vmem:[%s1 + $0x90] sm:$0xff]
  %v240 = vld [vmem:[%s1 + $0x98] sm:$0xff]
  %v241 = vld [vmem:[%s1 + $0xa0] sm:$0xff]
  %v242 = vld [vmem:[%s1 + $0xa8] sm:$0xff]
  %v243 = vld [vmem:[%s1 + $0xb0] sm:$0xff]
  %v244 = vld [vmem:[%s1 + $0xb8] sm:$0xff]
  %v245 = vld [vmem:[%s1 + $0xc0] sm:$0xff]
  %v246 = vld [vmem:[%s1 + $0xc8] sm:$0xff]
  %v247 = vld [vmem:[%s1 + $0xd0] sm:$0xff]
  %v248 = vld [vmem:[%s1 + $0xd8] sm:$0xff]
  %v249 = vld [vmem:[%s1 + $0xe0] sm:$0xff]
  %v250 = vld [vmem:[%s1 + $0xe8] sm:$0xff]
  %v251 = vld [vmem:[%s1 + $0xf0] sm:$0xff]
  %v252 = vld [vmem:[%s1 + $0xf8] sm:$0xff]
  %v253 = vld [vmem:[%s3] sm:$0x1]
  %s254 = scalar_lea.vmem %s4, 72
  %255 = vst [vmem:[%s254] sm:$0x1] %v253
  %v256 = vld [vmem:[%s2] sm:$0xff]
  %v257 = vld [vmem:[%s2 + $0x8] sm:$0xff]
  %v258 = vld [vmem:[%s2 + $0x10] sm:$0xff]
  %v259 = vld [vmem:[%s2 + $0x18] sm:$0xff]
  %v260 = vld [vmem:[%s2 + $0x20] sm:$0xff]
  %v261 = vld [vmem:[%s2 + $0x28] sm:$0xff]
  %v262 = vld [vmem:[%s2 + $0x30] sm:$0xff]
  %v263 = vld [vmem:[%s2 + $0x38] sm:$0xff]
  %v272 = vunpack.c.l.b16 %v213
  %v273 = vunpack.c.h.b16 %v213
  %v274 = vunpack.c.l.b16 %v214
  %v275 = vunpack.c.h.b16 %v214
  %v276 = vunpack.c.l.b16 %v215
  %v277 = vunpack.c.h.b16 %v215
  %v278 = vunpack.c.l.b16 %v216
  %v279 = vunpack.c.h.b16 %v216
  %v280 = vunpack.c.l.b16 %v217
  %v281 = vunpack.c.h.b16 %v217
  %v282 = vunpack.c.l.b16 %v218
  %v283 = vunpack.c.h.b16 %v218
  %v284 = vunpack.c.l.b16 %v219
  %v285 = vunpack.c.h.b16 %v219
  %v286 = vunpack.c.l.b16 %v220
  %v287 = vunpack.c.h.b16 %v220
  %v288 = vpack.c.b16 %v274, %v272
  %v289 = vpack.c.b16 %v275, %v273
  %v290 = vpack.c.b16 %v278, %v276
  %v291 = vpack.c.b16 %v279, %v277
  %v292 = vpack.c.b16 %v282, %v280
  %v293 = vpack.c.b16 %v283, %v281
  %v294 = vpack.c.b16 %v286, %v284
  %v295 = vpack.c.b16 %v287, %v285
  %304 = vmatprep.subr.mxu0 0.0
  %305 = vmatpush1.msra.mxu0 %v221
  %306 = vmatprep.subr.mxu0 0.0
  %307 = vmatpush1.msra.mxu0 %v222
  %308 = vmatprep.subr.mxu0 0.0
  %309 = vmatpush1.msra.mxu0 %v223
  %310 = vmatprep.subr.mxu0 0.0
  %311 = vmatpush1.msra.mxu0 %v224
  %312 = vmatprep.subr.mxu0 0.0
  %313 = vmatpush1.msra.mxu0 %v225
  %314 = vmatprep.subr.mxu0 0.0
  %315 = vmatpush1.msra.mxu0 %v226
  %316 = vmatprep.subr.mxu0 0.0
  %317 = vmatpush1.msra.mxu0 %v227
  %318 = vmatprep.subr.mxu0 0.0
  %319 = vmatpush1.msra.mxu0 %v228
  %320 = vmatprep.subr.mxu0 0.0
  %321 = vmatpush1.msra.mxu0 %v229
  %322 = vmatprep.subr.mxu0 0.0
  %323 = vmatpush1.msra.mxu0 %v230
  %324 = vmatprep.subr.mxu0 0.0
  %325 = vmatpush1.msra.mxu0 %v231
  %326 = vmatprep.subr.mxu0 0.0
  %327 = vmatpush1.msra.mxu0 %v232
  %328 = vmatprep.subr.mxu0 0.0
  %329 = vmatpush1.msra.mxu0 %v233
  %330 = vmatprep.subr.mxu0 0.0
  %331 = vmatpush1.msra.mxu0 %v234
  %332 = vmatprep.subr.mxu0 0.0
  %333 = vmatpush1.msra.mxu0 %v235
  %334 = vmatprep.subr.mxu0 0.0
  %335 = vmatpush1.msra.mxu0 %v236
  %336 = vmatprep.subr.mxu0 0.0
  %337 = vmatpush1.msra.mxu0 %v237
  %338 = vmatprep.subr.mxu0 0.0
  %339 = vmatpush1.msra.mxu0 %v238
  %340 = vmatprep.subr.mxu0 0.0
  %341 = vmatpush1.msra.mxu0 %v239
  %342 = vmatprep.subr.mxu0 0.0
  %343 = vmatpush1.msra.mxu0 %v240
  %344 = vmatprep.subr.mxu0 0.0
  %345 = vmatpush1.msra.mxu0 %v241
  %346 = vmatprep.subr.mxu0 0.0
  %347 = vmatpush1.msra.mxu0 %v242
  %348 = vmatprep.subr.mxu0 0.0
  %349 = vmatpush1.msra.mxu0 %v243
  %350 = vmatprep.subr.mxu0 0.0
  %351 = vmatpush1.msra.mxu0 %v244
  %352 = vmatprep.subr.mxu0 0.0
  %353 = vmatpush1.msra.mxu0 %v245
  %354 = vmatprep.subr.mxu0 0.0
  %355 = vmatpush1.msra.mxu0 %v246
  %356 = vmatprep.subr.mxu0 0.0
  %357 = vmatpush1.msra.mxu0 %v247
  %358 = vmatprep.subr.mxu0 0.0
  %359 = vmatpush1.msra.mxu0 %v248
  %360 = vmatprep.subr.mxu0 0.0
  %361 = vmatpush1.msra.mxu0 %v249
  %362 = vmatprep.subr.mxu0 0.0
  %363 = vmatpush1.msra.mxu0 %v250
  %364 = vmatprep.subr.mxu0 0.0
  %365 = vmatpush1.msra.mxu0 %v251
  %366 = vmatprep.subr.mxu0 0.0
  %367 = vmatpush1.msra.mxu0 %v252
  %368 = vmatprep.mubr.bf16.mxu0 %v289
  %369 = vmatmul.mubr.bf16.gmra.mrb[0].mxu0 %v288
  %v370 = vpop.f32.mrb[0].mxu0
  %v371 = vadd.f32 %v256, %v370
  %v372 = vpop.f32.mrb[0].mxu0
  %v373 = vpop.f32.mrb[0].mxu0
  %v374 = vadd.f32 %v257, %v373
  %v375 = vpop.f32.mrb[0].mxu0
  %376 = vmatprep.mubr.bf16.mxu0 %v291
  %377 = vmatmul.mubr.bf16.gmra.mrb[0].mxu0 %v290
  %v378 = vpop.f32.mrb[0].mxu0
  %v379 = vadd.f32 %v258, %v378
  %v380 = vpop.f32.mrb[0].mxu0
  %v381 = vpop.f32.mrb[0].mxu0
  %v382 = vadd.f32 %v259, %v381
  %v383 = vpop.f32.mrb[0].mxu0
  %384 = vmatprep.mubr.bf16.mxu0 %v293
  %385 = vmatmul.mubr.bf16.gmra.mrb[0].mxu0 %v292
  %v386 = vpop.f32.mrb[0].mxu0
  %v387 = vadd.f32 %v260, %v386
  %v388 = vpop.f32.mrb[0].mxu0
  %v389 = vpop.f32.mrb[0].mxu0
  %v390 = vadd.f32 %v261, %v389
  %v391 = vpop.f32.mrb[0].mxu0
  %392 = vmatprep.mubr.bf16.mxu0 %v295
  %393 = vmatmul.mubr.bf16.gmra.mrb[0].mxu0 %v294
  %v394 = vpop.f32.mrb[0].mxu0
  %v395 = vadd.f32 %v262, %v394
  %v396 = vpop.f32.mrb[0].mxu0
  %v397 = vpop.f32.mrb[0].mxu0
  %v398 = vadd.f32 %v263, %v397
  %v399 = vpop.f32.mrb[0].mxu0
  %400 = vdwg.mxu0
  %401 = vst [vmem:[%s254 + $0x1] sm:$0xff] %v371
  %402 = vst [vmem:[%s254 + $0x9] sm:$0xff] %v374
  %403 = vst [vmem:[%s254 + $0x11] sm:$0xff] %v379
  %404 = vst [vmem:[%s254 + $0x19] sm:$0xff] %v382
  %405 = vst [vmem:[%s254 + $0x21] sm:$0xff] %v387
  %406 = vst [vmem:[%s254 + $0x29] sm:$0xff] %v390
  %407 = vst [vmem:[%s254 + $0x31] sm:$0xff] %v395
  %408 = vst [vmem:[%s254 + $0x39] sm:$0xff] %v398
  // Predicated region
  $region18: #{stt_embd_patch_forward.1} parent=0 // pred_check
    _
  $region19: #{stt_embd_patch_forward.1} parent=0 // pred_check_branch
    %410 = sbr.rel (0) target = $region21
  $region20: #{stt_embd_patch_forward.1} parent=0 // pred_region
    _
  $region21: #{stt_embd_patch_forward.1} parent=0 // pred_fallthru
    _
  // Predicated region
  $region22: #{stt_embd_patch_forward.1} parent=0 // pred_check
    _
  $region23: #{stt_embd_patch_forward.1} parent=0 // pred_check_branch
    %412 = sbr.rel (0) target = $region25
  $region24: #{stt_embd_patch_forward.1} parent=0 // pred_region
    _
  $region25: #{stt_embd_patch_forward.1} parent=0 // pred_fallthru
    _

</llo_original>
